<compile_context>
chip_gen: v5e
topology: v5e:2x2
jax: 0.10.0
libtpu: 0.0.40
codegen_flags: <defaults>
</compile_context>

<pallas_src>
import jax
import jax.numpy as jnp
from jax.experimental import pallas as pl
from jax.experimental.pallas import tpu as pltpu

BN_EPS = 1e-5
LANES = 128  # lane-dense padded feature width carried end-to-end


def _round_up(x, m):
    return (x + m - 1) // m * m


def layer_dims(length):
    # (fan_in, fan_out) of lin1, lin2, lin3, lin6, lin7, lin8
    return [(length, 24), (24, 12), (12, 6), (6, 12), (12, 24), (24, length)]


def make_autoencoder_kernel(kpad, bias_row):
    """kpad: contraction rows kept per layer plane; bias_row: sublane index of bias."""

    def kernel(x_ref, wb_ref, o_ref):
        # x_ref: (B, 128) f32   wb_ref: (6, kpad+8, 128) bf16   o_ref: (B, 128) f32

        def bn(h):
            # Fused single-pass batch statistics: two independent axis-0 reductions.
            inv_b = 1.0 / h.shape[0]
            mean = jnp.sum(h, axis=0, keepdims=True) * inv_b
            ex2 = jnp.sum(h * h, axis=0, keepdims=True) * inv_b
            var = jnp.maximum(ex2 - mean * mean, 0.0)  # clamp f32 cancellation
            return (h - mean) * jax.lax.rsqrt(var + BN_EPS)

        def layer(h, i):
            # One full-plane load + upcast; static slices afterwards are free.
            wb = wb_ref[i].astype(jnp.float32)                # (kpad+8, 128)
            y = jnp.dot(h[:, :kpad], wb[:kpad, :],
                        preferred_element_type=jnp.float32)   # (B, 128)
            y = y + wb[bias_row:bias_row + 1, :]              # bias row
            return jnp.tanh(y)

        h = layer(x_ref[...], 0)   # tanh(lin1(x))
        h = layer(bn(h), 1)        # tanh(lin2(bn(x)))
        h = layer(bn(h), 2)        # tanh(lin3(bn(x)))
        h = layer(h, 3)            # tanh(lin6(x))
        h = layer(bn(h), 4)        # tanh(lin7(bn(x)))
        h = layer(bn(h), 5)        # tanh(lin8(bn(x)))

        o_ref[...] = h.astype(o_ref.dtype)

    return kernel


def make_params(length, key):
    """Parameter shapes/init mirroring AutoEncoder.__init__.

    Linear weights ~ U(-2, 2) (as the module does); biases ~ U(-1/sqrt(fan_in),
    1/sqrt(fan_in)) (PyTorch default).  Weights are returned as (in, out).
    """
    params = []
    for fan_in, fan_out in layer_dims(length):
        key, kw, kb = jax.random.split(key, 3)
        w = jax.random.uniform(kw, (fan_in, fan_out), jnp.float32, -2.0, 2.0)
        bound = 1.0 / jnp.sqrt(float(fan_in))
        b = jax.random.uniform(kb, (1, fan_out), jnp.float32, -bound, bound)
        params.append((w, b))
    return params


def pack_params(params, weight_dtype=jnp.bfloat16):
    """Pack weights + biases into ONE zero-padded stack.

    Shape (n_layers, KPAD + 8, 128):
      rows 0 .. fan_in-1 : weight rows (zero beyond fan_in / fan_out)
      row  KPAD          : bias
      rows KPAD+1 ..     : zero padding (sublane alignment)
    Zero padding is numerically exact: padded lanes stay 0 through matmul
    (+0 bias), tanh(0)=0 and BatchNorm (mean 0, var 0 -> 0).
    """
    n = len(params)
    max_fan_in = max(w.shape[0] for w, _ in params)
    kpad = _round_up(max_fan_in, 8)
    bias_row = kpad
    sub = kpad + 8
    wb = jnp.zeros((n, sub, LANES), weight_dtype)
    for i, (w, b) in enumerate(params):
        wb = wb.at[i, : w.shape[0], : w.shape[1]].set(w.astype(weight_dtype))
        wb = wb.at[i, bias_row, : b.shape[1]].set(b[0].astype(weight_dtype))
    return wb, kpad, bias_row


def autoencoder_forward(x, params, weight_dtype=jnp.bfloat16):
    B, length = x.shape
    wb, kpad, bias_row = pack_params(params, weight_dtype)

    # Lane-dense padded input (zeros beyond `length` stay zero through the net).
    x_p = jnp.zeros((B, LANES), jnp.float32).at[:, :length].set(x)

    n_layers = len(params)
    flops = 2 * B * kpad * LANES * n_layers          # padded matmul FLOPs executed
    transcendentals = B * LANES * n_layers           # padded tanh count
    bytes_accessed = (x_p.size * x_p.dtype.itemsize
                      + wb.size * wb.dtype.itemsize
                      + B * LANES * 4)

    vmem = pl.BlockSpec(memory_space=pltpu.MemorySpace.VMEM)
    out_p = pl.pallas_call(
        make_autoencoder_kernel(kpad, bias_row),
        out_shape=jax.ShapeDtypeStruct((B, LANES), jnp.float32),
        in_specs=[vmem, vmem],
        out_specs=vmem,
        cost_estimate=pl.CostEstimate(
            flops=flops,
            transcendentals=transcendentals,
            bytes_accessed=bytes_accessed,
        ),
    )(x_p, wb)
    return out_p[:, :length]


def _reference_forward(x, params, weight_dtype=jnp.bfloat16):
    # Pure-JAX reference (same math: training-mode BN with biased variance),
    # using the SAME bf16-rounded parameters the kernel consumes.
    def bn(h):
        mean = jnp.mean(h, axis=0, keepdims=True)
        ex2 = jnp.mean(h * h, axis=0, keepdims=True)
        var = jnp.maximum(ex2 - mean * mean, 0.0)
        return (h - mean) * jax.lax.rsqrt(var + BN_EPS)

    q = [(w.astype(weight_dtype).astype(jnp.float32),
          b.astype(weight_dtype).astype(jnp.float32)) for w, b in params]
    (w1, b1), (w2, b2), (w3, b3), (w6, b6), (w7, b7), (w8, b8) = q
    h = jnp.tanh(x @ w1 + b1)
    h = jnp.tanh(bn(h) @ w2 + b2)
    h = jnp.tanh(bn(h) @ w3 + b3)
    h = jnp.tanh(h @ w6 + b6)
    h = jnp.tanh(bn(h) @ w7 + b7)
    h = jnp.tanh(bn(h) @ w8 + b8)
    return h


if __name__ == "__main__":
    length = 16
    batch = 8

    key = jax.random.PRNGKey(0)
    key, kx = jax.random.split(key)
    x = jax.random.normal(kx, (batch, length), jnp.float32)

    params = make_params(length, key)

    out = autoencoder_forward(x, params)
    out = jax.block_until_ready(out)

    ref = _reference_forward(x, params)
    assert out.shape == (batch, length)
    # Tolerance accounts for MXU default-precision f32 matmuls and the fp
    # sensitivity of BN when a unit's batch variance is ~eps (saturated tanh).
    assert jnp.allclose(out, ref, atol=2e-3, rtol=2e-3), "mismatch vs reference"

    print("KERNEL_OK")
</pallas_src>

<mosaic_0001>
module attributes {stable_mosaic.version = 11 : i64} {
  func.func @kernel(%arg0: memref<8x128xf32, #tpu.memory_space<vmem>>, %arg1: memref<6x32x128xbf16, #tpu.memory_space<vmem>>, %arg2: memref<8x128xf32, #tpu.memory_space<vmem>>) attributes {dimension_semantics = [], scalar_prefetch = 0 : i64, scratch_operands = 0 : i64, tpu.core_type = #tpu.core_type<tc>} {
    %c0 = arith.constant 0 : index
    %c0_0 = arith.constant 0 : index
    %0 = vector.load %arg0[%c0, %c0_0] : memref<8x128xf32, #tpu.memory_space<vmem>>, vector<8x128xf32>
    %c0_1 = arith.constant 0 : index
    %c0_2 = arith.constant 0 : index
    %c0_3 = arith.constant 0 : index
    %1 = vector.load %arg1[%c0_1, %c0_2, %c0_3] : memref<6x32x128xbf16, #tpu.memory_space<vmem>>, vector<1x32x128xbf16>
    %2 = vector.shape_cast %1 : vector<1x32x128xbf16> to vector<32x128xbf16>
    %3 = arith.extf %2 : vector<32x128xbf16> to vector<32x128xf32>
    %4 = vector.extract_strided_slice %0 {offsets = [0, 0], sizes = [8, 24], strides = [1, 1]} : vector<8x128xf32> to vector<8x24xf32>
    %5 = vector.extract_strided_slice %3 {offsets = [0, 0], sizes = [24, 128], strides = [1, 1]} : vector<32x128xf32> to vector<24x128xf32>
    %cst = arith.constant dense<0.000000e+00> : vector<8x128xf32>
    %6 = tpu.matmul %4, %5, %cst {dimension_numbers = #tpu.dot_dimension_numbers<[1], [0], [0], [1], [0, 0, 1, 1], [], []>} : vector<8x24xf32>, vector<24x128xf32>, vector<8x128xf32> -> vector<8x128xf32>
    %7 = vector.extract_strided_slice %3 {offsets = [24, 0], sizes = [1, 128], strides = [1, 1]} : vector<32x128xf32> to vector<1x128xf32>
    %8 = vector.broadcast %7 : vector<1x128xf32> to vector<8x128xf32>
    %9 = arith.addf %6, %8 : vector<8x128xf32>
    %10 = math.tanh %9 : vector<8x128xf32>
    %cst_4 = arith.constant dense<0.000000e+00> : vector<128xf32>
    %11 = vector.multi_reduction <add>, %10, %cst_4 [0] : vector<8x128xf32> to vector<128xf32>
    %12 = vector.shape_cast %11 : vector<128xf32> to vector<1x128xf32>
    %cst_5 = arith.constant 1.250000e-01 : f32
    %13 = vector.broadcast %cst_5 : f32 to vector<1x128xf32>
    %14 = arith.mulf %12, %13 : vector<1x128xf32>
    %15 = arith.mulf %10, %10 : vector<8x128xf32>
    %cst_6 = arith.constant dense<0.000000e+00> : vector<128xf32>
    %16 = vector.multi_reduction <add>, %15, %cst_6 [0] : vector<8x128xf32> to vector<128xf32>
    %17 = vector.shape_cast %16 : vector<128xf32> to vector<1x128xf32>
    %cst_7 = arith.constant 1.250000e-01 : f32
    %18 = vector.broadcast %cst_7 : f32 to vector<1x128xf32>
    %19 = arith.mulf %17, %18 : vector<1x128xf32>
    %20 = arith.mulf %14, %14 : vector<1x128xf32>
    %21 = arith.subf %19, %20 : vector<1x128xf32>
    %cst_8 = arith.constant 0.000000e+00 : f32
    %22 = vector.broadcast %cst_8 : f32 to vector<1x128xf32>
    %23 = arith.maximumf %21, %22 : vector<1x128xf32>
    %24 = vector.broadcast %14 : vector<1x128xf32> to vector<8x128xf32>
    %25 = arith.subf %10, %24 : vector<8x128xf32>
    %cst_9 = arith.constant 9.99999974E-6 : f32
    %26 = vector.broadcast %cst_9 : f32 to vector<1x128xf32>
    %27 = arith.addf %23, %26 : vector<1x128xf32>
    %28 = math.rsqrt %27 : vector<1x128xf32>
    %29 = vector.broadcast %28 : vector<1x128xf32> to vector<8x128xf32>
    %30 = arith.mulf %25, %29 : vector<8x128xf32>
    %c1 = arith.constant 1 : index
    %c0_10 = arith.constant 0 : index
    %c0_11 = arith.constant 0 : index
    %31 = vector.load %arg1[%c1, %c0_10, %c0_11] : memref<6x32x128xbf16, #tpu.memory_space<vmem>>, vector<1x32x128xbf16>
    %32 = vector.shape_cast %31 : vector<1x32x128xbf16> to vector<32x128xbf16>
    %33 = arith.extf %32 : vector<32x128xbf16> to vector<32x128xf32>
    %34 = vector.extract_strided_slice %30 {offsets = [0, 0], sizes = [8, 24], strides = [1, 1]} : vector<8x128xf32> to vector<8x24xf32>
    %35 = vector.extract_strided_slice %33 {offsets = [0, 0], sizes = [24, 128], strides = [1, 1]} : vector<32x128xf32> to vector<24x128xf32>
    %cst_12 = arith.constant dense<0.000000e+00> : vector<8x128xf32>
    %36 = tpu.matmul %34, %35, %cst_12 {dimension_numbers = #tpu.dot_dimension_numbers<[1], [0], [0], [1], [0, 0, 1, 1], [], []>} : vector<8x24xf32>, vector<24x128xf32>, vector<8x128xf32> -> vector<8x128xf32>
    %37 = vector.extract_strided_slice %33 {offsets = [24, 0], sizes = [1, 128], strides = [1, 1]} : vector<32x128xf32> to vector<1x128xf32>
    %38 = vector.broadcast %37 : vector<1x128xf32> to vector<8x128xf32>
    %39 = arith.addf %36, %38 : vector<8x128xf32>
    %40 = math.tanh %39 : vector<8x128xf32>
    %cst_13 = arith.constant dense<0.000000e+00> : vector<128xf32>
    %41 = vector.multi_reduction <add>, %40, %cst_13 [0] : vector<8x128xf32> to vector<128xf32>
    %42 = vector.shape_cast %41 : vector<128xf32> to vector<1x128xf32>
    %cst_14 = arith.constant 1.250000e-01 : f32
    %43 = vector.broadcast %cst_14 : f32 to vector<1x128xf32>
    %44 = arith.mulf %42, %43 : vector<1x128xf32>
    %45 = arith.mulf %40, %40 : vector<8x128xf32>
    %cst_15 = arith.constant dense<0.000000e+00> : vector<128xf32>
    %46 = vector.multi_reduction <add>, %45, %cst_15 [0] : vector<8x128xf32> to vector<128xf32>
    %47 = vector.shape_cast %46 : vector<128xf32> to vector<1x128xf32>
    %cst_16 = arith.constant 1.250000e-01 : f32
    %48 = vector.broadcast %cst_16 : f32 to vector<1x128xf32>
    %49 = arith.mulf %47, %48 : vector<1x128xf32>
    %50 = arith.mulf %44, %44 : vector<1x128xf32>
    %51 = arith.subf %49, %50 : vector<1x128xf32>
    %cst_17 = arith.constant 0.000000e+00 : f32
    %52 = vector.broadcast %cst_17 : f32 to vector<1x128xf32>
    %53 = arith.maximumf %51, %52 : vector<1x128xf32>
    %54 = vector.broadcast %44 : vector<1x128xf32> to vector<8x128xf32>
    %55 = arith.subf %40, %54 : vector<8x128xf32>
    %cst_18 = arith.constant 9.99999974E-6 : f32
    %56 = vector.broadcast %cst_18 : f32 to vector<1x128xf32>
    %57 = arith.addf %53, %56 : vector<1x128xf32>
    %58 = math.rsqrt %57 : vector<1x128xf32>
    %59 = vector.broadcast %58 : vector<1x128xf32> to vector<8x128xf32>
    %60 = arith.mulf %55, %59 : vector<8x128xf32>
    %c2 = arith.constant 2 : index
    %c0_19 = arith.constant 0 : index
    %c0_20 = arith.constant 0 : index
    %61 = vector.load %arg1[%c2, %c0_19, %c0_20] : memref<6x32x128xbf16, #tpu.memory_space<vmem>>, vector<1x32x128xbf16>
    %62 = vector.shape_cast %61 : vector<1x32x128xbf16> to vector<32x128xbf16>
    %63 = arith.extf %62 : vector<32x128xbf16> to vector<32x128xf32>
    %64 = vector.extract_strided_slice %60 {offsets = [0, 0], sizes = [8, 24], strides = [1, 1]} : vector<8x128xf32> to vector<8x24xf32>
    %65 = vector.extract_strided_slice %63 {offsets = [0, 0], sizes = [24, 128], strides = [1, 1]} : vector<32x128xf32> to vector<24x128xf32>
    %cst_21 = arith.constant dense<0.000000e+00> : vector<8x128xf32>
    %66 = tpu.matmul %64, %65, %cst_21 {dimension_numbers = #tpu.dot_dimension_numbers<[1], [0], [0], [1], [0, 0, 1, 1], [], []>} : vector<8x24xf32>, vector<24x128xf32>, vector<8x128xf32> -> vector<8x128xf32>
    %67 = vector.extract_strided_slice %63 {offsets = [24, 0], sizes = [1, 128], strides = [1, 1]} : vector<32x128xf32> to vector<1x128xf32>
    %68 = vector.broadcast %67 : vector<1x128xf32> to vector<8x128xf32>
    %69 = arith.addf %66, %68 : vector<8x128xf32>
    %70 = math.tanh %69 : vector<8x128xf32>
    %c3 = arith.constant 3 : index
    %c0_22 = arith.constant 0 : index
    %c0_23 = arith.constant 0 : index
    %71 = vector.load %arg1[%c3, %c0_22, %c0_23] : memref<6x32x128xbf16, #tpu.memory_space<vmem>>, vector<1x32x128xbf16>
    %72 = vector.shape_cast %71 : vector<1x32x128xbf16> to vector<32x128xbf16>
    %73 = arith.extf %72 : vector<32x128xbf16> to vector<32x128xf32>
    %74 = vector.extract_strided_slice %70 {offsets = [0, 0], sizes = [8, 24], strides = [1, 1]} : vector<8x128xf32> to vector<8x24xf32>
    %75 = vector.extract_strided_slice %73 {offsets = [0, 0], sizes = [24, 128], strides = [1, 1]} : vector<32x128xf32> to vector<24x128xf32>
    %cst_24 = arith.constant dense<0.000000e+00> : vector<8x128xf32>
    %76 = tpu.matmul %74, %75, %cst_24 {dimension_numbers = #tpu.dot_dimension_numbers<[1], [0], [0], [1], [0, 0, 1, 1], [], []>} : vector<8x24xf32>, vector<24x128xf32>, vector<8x128xf32> -> vector<8x128xf32>
    %77 = vector.extract_strided_slice %73 {offsets = [24, 0], sizes = [1, 128], strides = [1, 1]} : vector<32x128xf32> to vector<1x128xf32>
    %78 = vector.broadcast %77 : vector<1x128xf32> to vector<8x128xf32>
    %79 = arith.addf %76, %78 : vector<8x128xf32>
    %80 = math.tanh %79 : vector<8x128xf32>
    %cst_25 = arith.constant dense<0.000000e+00> : vector<128xf32>
    %81 = vector.multi_reduction <add>, %80, %cst_25 [0] : vector<8x128xf32> to vector<128xf32>
    %82 = vector.shape_cast %81 : vector<128xf32> to vector<1x128xf32>
    %cst_26 = arith.constant 1.250000e-01 : f32
    %83 = vector.broadcast %cst_26 : f32 to vector<1x128xf32>
    %84 = arith.mulf %82, %83 : vector<1x128xf32>
    %85 = arith.mulf %80, %80 : vector<8x128xf32>
    %cst_27 = arith.constant dense<0.000000e+00> : vector<128xf32>
    %86 = vector.multi_reduction <add>, %85, %cst_27 [0] : vector<8x128xf32> to vector<128xf32>
    %87 = vector.shape_cast %86 : vector<128xf32> to vector<1x128xf32>
    %cst_28 = arith.constant 1.250000e-01 : f32
    %88 = vector.broadcast %cst_28 : f32 to vector<1x128xf32>
    %89 = arith.mulf %87, %88 : vector<1x128xf32>
    %90 = arith.mulf %84, %84 : vector<1x128xf32>
    %91 = arith.subf %89, %90 : vector<1x128xf32>
    %cst_29 = arith.constant 0.000000e+00 : f32
    %92 = vector.broadcast %cst_29 : f32 to vector<1x128xf32>
    %93 = arith.maximumf %91, %92 : vector<1x128xf32>
    %94 = vector.broadcast %84 : vector<1x128xf32> to vector<8x128xf32>
    %95 = arith.subf %80, %94 : vector<8x128xf32>
    %cst_30 = arith.constant 9.99999974E-6 : f32
    %96 = vector.broadcast %cst_30 : f32 to vector<1x128xf32>
    %97 = arith.addf %93, %96 : vector<1x128xf32>
    %98 = math.rsqrt %97 : vector<1x128xf32>
    %99 = vector.broadcast %98 : vector<1x128xf32> to vector<8x128xf32>
    %100 = arith.mulf %95, %99 : vector<8x128xf32>
    %c4 = arith.constant 4 : index
    %c0_31 = arith.constant 0 : index
    %c0_32 = arith.constant 0 : index
    %101 = vector.load %arg1[%c4, %c0_31, %c0_32] : memref<6x32x128xbf16, #tpu.memory_space<vmem>>, vector<1x32x128xbf16>
    %102 = vector.shape_cast %101 : vector<1x32x128xbf16> to vector<32x128xbf16>
    %103 = arith.extf %102 : vector<32x128xbf16> to vector<32x128xf32>
    %104 = vector.extract_strided_slice %100 {offsets = [0, 0], sizes = [8, 24], strides = [1, 1]} : vector<8x128xf32> to vector<8x24xf32>
    %105 = vector.extract_strided_slice %103 {offsets = [0, 0], sizes = [24, 128], strides = [1, 1]} : vector<32x128xf32> to vector<24x128xf32>
    %cst_33 = arith.constant dense<0.000000e+00> : vector<8x128xf32>
    %106 = tpu.matmul %104, %105, %cst_33 {dimension_numbers = #tpu.dot_dimension_numbers<[1], [0], [0], [1], [0, 0, 1, 1], [], []>} : vector<8x24xf32>, vector<24x128xf32>, vector<8x128xf32> -> vector<8x128xf32>
    %107 = vector.extract_strided_slice %103 {offsets = [24, 0], sizes = [1, 128], strides = [1, 1]} : vector<32x128xf32> to vector<1x128xf32>
    %108 = vector.broadcast %107 : vector<1x128xf32> to vector<8x128xf32>
    %109 = arith.addf %106, %108 : vector<8x128xf32>
    %110 = math.tanh %109 : vector<8x128xf32>
    %cst_34 = arith.constant dense<0.000000e+00> : vector<128xf32>
    %111 = vector.multi_reduction <add>, %110, %cst_34 [0] : vector<8x128xf32> to vector<128xf32>
    %112 = vector.shape_cast %111 : vector<128xf32> to vector<1x128xf32>
    %cst_35 = arith.constant 1.250000e-01 : f32
    %113 = vector.broadcast %cst_35 : f32 to vector<1x128xf32>
    %114 = arith.mulf %112, %113 : vector<1x128xf32>
    %115 = arith.mulf %110, %110 : vector<8x128xf32>
    %cst_36 = arith.constant dense<0.000000e+00> : vector<128xf32>
    %116 = vector.multi_reduction <add>, %115, %cst_36 [0] : vector<8x128xf32> to vector<128xf32>
    %117 = vector.shape_cast %116 : vector<128xf32> to vector<1x128xf32>
    %cst_37 = arith.constant 1.250000e-01 : f32
    %118 = vector.broadcast %cst_37 : f32 to vector<1x128xf32>
    %119 = arith.mulf %117, %118 : vector<1x128xf32>
    %120 = arith.mulf %114, %114 : vector<1x128xf32>
    %121 = arith.subf %119, %120 : vector<1x128xf32>
    %cst_38 = arith.constant 0.000000e+00 : f32
    %122 = vector.broadcast %cst_38 : f32 to vector<1x128xf32>
    %123 = arith.maximumf %121, %122 : vector<1x128xf32>
    %124 = vector.broadcast %114 : vector<1x128xf32> to vector<8x128xf32>
    %125 = arith.subf %110, %124 : vector<8x128xf32>
    %cst_39 = arith.constant 9.99999974E-6 : f32
    %126 = vector.broadcast %cst_39 : f32 to vector<1x128xf32>
    %127 = arith.addf %123, %126 : vector<1x128xf32>
    %128 = math.rsqrt %127 : vector<1x128xf32>
    %129 = vector.broadcast %128 : vector<1x128xf32> to vector<8x128xf32>
    %130 = arith.mulf %125, %129 : vector<8x128xf32>
    %c5 = arith.constant 5 : index
    %c0_40 = arith.constant 0 : index
    %c0_41 = arith.constant 0 : index
    %131 = vector.load %arg1[%c5, %c0_40, %c0_41] : memref<6x32x128xbf16, #tpu.memory_space<vmem>>, vector<1x32x128xbf16>
    %132 = vector.shape_cast %131 : vector<1x32x128xbf16> to vector<32x128xbf16>
    %133 = arith.extf %132 : vector<32x128xbf16> to vector<32x128xf32>
    %134 = vector.extract_strided_slice %130 {offsets = [0, 0], sizes = [8, 24], strides = [1, 1]} : vector<8x128xf32> to vector<8x24xf32>
    %135 = vector.extract_strided_slice %133 {offsets = [0, 0], sizes = [24, 128], strides = [1, 1]} : vector<32x128xf32> to vector<24x128xf32>
    %cst_42 = arith.constant dense<0.000000e+00> : vector<8x128xf32>
    %136 = tpu.matmul %134, %135, %cst_42 {dimension_numbers = #tpu.dot_dimension_numbers<[1], [0], [0], [1], [0, 0, 1, 1], [], []>} : vector<8x24xf32>, vector<24x128xf32>, vector<8x128xf32> -> vector<8x128xf32>
    %137 = vector.extract_strided_slice %133 {offsets = [24, 0], sizes = [1, 128], strides = [1, 1]} : vector<32x128xf32> to vector<1x128xf32>
    %138 = vector.broadcast %137 : vector<1x128xf32> to vector<8x128xf32>
    %139 = arith.addf %136, %138 : vector<8x128xf32>
    %140 = math.tanh %139 : vector<8x128xf32>
    %c0_43 = arith.constant 0 : index
    %c0_44 = arith.constant 0 : index
    %141 = vector.load %arg2[%c0_43, %c0_44] : memref<8x128xf32, #tpu.memory_space<vmem>>, vector<8x128xf32>
    tpu.vector_store %arg2[%c0_43, %c0_44], %140 {strides = array<i32>} : memref<8x128xf32, #tpu.memory_space<vmem>>, vector<8x128xf32>,
    return
  }
}

</mosaic_0001>

<llo_original>
// kernel: tpu_custom_call.1
$region0: #{tpu_custom_call.1}
  #allocation0 [shape = 'u32[]', space=smem, size = 0x4, offset = 0x4, fixed_abs, tag = 'smem constant byte address 0x4 - core index']
  #allocation1 [shape = 'u32[72,128]{1,0:T(1,128)}', space=vmem, size = 0x9000, scoped, tag = 'internal scratch']
  %s0 = inlined_call_operand.hbm [shape: f32[8,128], index: 0, kind: input, shape index: {}]
  %s1 = inlined_call_operand.hbm [shape: bf16[6,32,128], index: 1, kind: input, shape index: {}]
  %s2 = inlined_call_operand.hbm [shape: f32[8,128], index: 2, kind: output, shape index: {}]
  %s3 = sld [smem:[#allocation0]]
  $region26: #{tpu_custom_call.1} parent=0
    _
  %s5 = ssub.s32 1, %s3
  %s6 = scalar_select 0, %s5, %s3
  $region1: #{tpu_custom_call.1} parent=0
    #allocation2 [shape = 'u8[4096]{0}', space=vmem, size = 0x1000, scoped, tag = 'input window, operand 0, single buffered']
    #allocation3 [shape = 's32[1]{0}', space=sflag, size = 0x4, scoped, tag = 'scoped memory for tpu_custom_call.1']
    #allocation4 [shape = 's32[1]{0}', space=sflag, size = 0x4, scoped, tag = 'scoped memory for tpu_custom_call.1']
    #allocation5 [shape = 'u8[49152]{0}', space=vmem, size = 0xc000, scoped, tag = 'input window, operand 1, single buffered']
    #allocation6 [shape = 's32[1]{0}', space=sflag, size = 0x4, scoped, tag = 'scoped memory for tpu_custom_call.1']
    #allocation7 [shape = 'u8[4096]{0}', space=vmem, size = 0x1000, scoped, tag = 'output window, operand 0, single buffered']
    %7 = vsyncpa [#allocation3], 0
    %8 = vsyncpa [#allocation6], 0
    %9 = vsyncpa [#allocation4], 0
    // Predicated region
    $region2: #{tpu_custom_call.1} parent=1 // pred_check
      _
    $region3: #{tpu_custom_call.1} parent=1 // pred_check_branch
      %11 = sbr.rel (0) target = $region5
    $region4: #{tpu_custom_call.1} parent=1 // pred_region
      %13 = vsyncadd [#allocation3], 0
      %s15 = sshll.u32 %s0, 4
      %s16 = int_to_ptr.hbm [resolvable:$true] %s15
      %s17 = sshll.u32 [#allocation2], 4
      %s18 = int_to_ptr.vmem [resolvable:$true] %s17
      %20 = dma.hbm_to_vmem [thread:$0]  %s16, 128, %s18, [#allocation3]
    $region5: #{tpu_custom_call.1} parent=1 // pred_fallthru
      _
    // Predicated region
    $region6: #{tpu_custom_call.1} parent=1 // pred_check
      _
    $region7: #{tpu_custom_call.1} parent=1 // pred_check_branch
      %22 = sbr.rel (0) target = $region9
    $region8: #{tpu_custom_call.1} parent=1 // pred_region
      %24 = vsyncadd [#allocation6], 0
      %s25 = sshll.u32 %s1, 4
      %s26 = int_to_ptr.hbm [resolvable:$true] %s25
      %s27 = sshll.u32 [#allocation5], 4
      %s28 = int_to_ptr.vmem [resolvable:$true] %s27
      %33 = dma.hbm_to_vmem [thread:$0]  %s26, 1536, %s28, [#allocation6], 64, 64, 4
    $region9: #{tpu_custom_call.1} parent=1 // pred_fallthru
      _
    // Predicated region
    $region10: #{tpu_custom_call.1} parent=1 // pred_check
      _
    $region11: #{tpu_custom_call.1} parent=1 // pred_check_branch
      %35 = sbr.rel (0) target = $region13
    $region12: #{tpu_custom_call.1} parent=1 // pred_region
      %37 = dma.done [#allocation3], 128
    $region13: #{tpu_custom_call.1} parent=1 // pred_fallthru
      _
    // Predicated region
    $region14: #{tpu_custom_call.1} parent=1 // pred_check
      _
    $region15: #{tpu_custom_call.1} parent=1 // pred_check_branch
      %39 = sbr.rel (0) target = $region17
    $region16: #{tpu_custom_call.1} parent=1 // pred_region
      %41 = dma.done [#allocation6], 1536
    $region17: #{tpu_custom_call.1} parent=1 // pred_fallthru
      _
    %v42 = vld [vmem:[#allocation2] sm:$0xff]
    %v43 = vld [vmem:[#allocation5] sm:$0xf]
    %v44 = vld [vmem:[#allocation5 + $0x4] sm:$0xf]
    %v45 = vld [vmem:[#allocation5 + $0x8] sm:$0xf]
    %v46 = vld [vmem:[#allocation5 + $0xc] sm:$0xf]
    %v47 = vunpack.c.l.bf16 %v43
    %v48 = vunpack.c.l.bf16 %v44
    %v49 = vunpack.c.l.bf16 %v45
    %v50 = vunpack.c.l.bf16 %v46
    %v51 = vperm.slane %v50, 0
    %vm52 = vcmask 195584
    %v54 = vsel %vm52, %v42, 0
    %56 = vmatpush.msra.mxu0 0.0
    %57 = vmatpush.msra.mxu0 0.0
    %58 = vmatpush.msra.mxu0 0.0
    %59 = vmatpush.msra.mxu0 0.0
    %60 = vmatpush.msra.mxu0 0.0
    %61 = vmatpush.msra.mxu0 0.0
    %62 = vmatpush.msra.mxu0 0.0
    %63 = vmatpush.msra.mxu0 0.0
    %64 = vmatpush.msra.mxu0 0.0
    %65 = vmatpush.msra.mxu0 0.0
    %66 = vmatpush.msra.mxu0 0.0
    %67 = vmatpush.msra.mxu0 0.0
    %68 = vmatpush.msra.mxu0 0.0
    %69 = vmatpush.msra.mxu0 %v49
    %70 = vmatpush.msra.mxu0 %v48
    %71 = vmatpush.msra.mxu0 %v47
    %72 = vmatmul.f32.gmra.mxu0 %v54
    %v73 = vpop.f32.mrf.mxu0
    %v74 = vadd.f32 %v51, %v73
    %75 = vdwg.mxu0
    %v76 = vtanh.pop %v74
    %v77 = vrot.slane %v76, 4
    %v78 = vadd.f32 %v76, %v77
    %v79 = vrot.slane %v78, 2
    %v80 = vadd.f32 %v78, %v79
    %v81 = vrot.slane %v80, 1
    %v82 = vadd.f32 %v80, %v81
    %v83 = vmul.f32 %v82, 0.125
    %v84 = vmul.f32 %v76, %v76
    %v85 = vrot.slane %v84, 4
    %v86 = vadd.f32 %v84, %v85
    %v87 = vrot.slane %v86, 2
    %v88 = vadd.f32 %v86, %v87
    %v89 = vrot.slane %v88, 1
    %v90 = vadd.f32 %v88, %v89
    %v91 = vmul.f32 %v90, 0.125
    %v92 = vmul.f32 %v83, %v83
    %v93 = vsub.f32 %v91, %v92
    %v94 = vmax.f32 %v93, 0.0
    %v95 = vsub.f32 %v76, %v83
    %v96 = vadd.f32 %v94, 1e-05
    %v97 = vrsqrt.pop %v96
    %v98 = vmul.f32 %v97, %v96
    %v99 = vmul.f32 %v98, %v97
    %v100 = vmul.f32 0.5, %v99
    %v101 = vsub.f32 1.5, %v100
    %v102 = vmul.f32 %v97, %v101
    %vm103 = vweird.f32 %v96
    %vm104 = vweird.f32 %v97
    %vm105 = vmor %vm103, %vm104
    %v106 = vsel %vm105, %v97, %v102
    %v107 = vmul.f32 %v95, %v106
    %s108 = scalar_lea.vmem [#allocation5], 16
    %v109 = vld [vmem:[%s108] sm:$0xf]
    %v110 = vld [vmem:[%s108 + $0x4] sm:$0xf]
    %v111 = vld [vmem:[%s108 + $0x8] sm:$0xf]
    %v112 = vld [vmem:[%s108 + $0xc] sm:$0xf]
    %v113 = vunpack.c.l.bf16 %v109
    %v114 = vunpack.c.l.bf16 %v110
    %v115 = vunpack.c.l.bf16 %v111
    %v116 = vunpack.c.l.bf16 %v112
    %v117 = vperm.slane %v116, 0
    %v119 = vsel %vm52, %v107, 0
    %121 = vmatpush.msra.mxu0 0.0
    %122 = vmatpush.msra.mxu0 0.0
    %123 = vmatpush.msra.mxu0 0.0
    %124 = vmatpush.msra.mxu0 0.0
    %125 = vmatpush.msra.mxu0 0.0
    %126 = vmatpush.msra.mxu0 0.0
    %127 = vmatpush.msra.mxu0 0.0
    %128 = vmatpush.msra.mxu0 0.0
    %129 = vmatpush.msra.mxu0 0.0
    %130 = vmatpush.msra.mxu0 0.0
    %131 = vmatpush.msra.mxu0 0.0
    %132 = vmatpush.msra.mxu0 0.0
    %133 = vmatpush.msra.mxu0 0.0
    %134 = vmatpush.msra.mxu0 %v115
    %135 = vmatpush.msra.mxu0 %v114
    %136 = vmatpush.msra.mxu0 %v113
    %137 = vmatmul.f32.gmra.mxu0 %v119
    %v138 = vpop.f32.mrf.mxu0
    %v139 = vadd.f32 %v117, %v138
    %140 = vdwg.mxu0
    %v141 = vtanh.pop %v139
    %v142 = vrot.slane %v141, 4
    %v143 = vadd.f32 %v141, %v142
    %v144 = vrot.slane %v143, 2
    %v145 = vadd.f32 %v143, %v144
    %v146 = vrot.slane %v145, 1
    %v147 = vadd.f32 %v145, %v146
    %v148 = vmul.f32 %v147, 0.125
    %v149 = vmul.f32 %v141, %v141
    %v150 = vrot.slane %v149, 4
    %v151 = vadd.f32 %v149, %v150
    %v152 = vrot.slane %v151, 2
    %v153 = vadd.f32 %v151, %v152
    %v154 = vrot.slane %v153, 1
    %v155 = vadd.f32 %v153, %v154
    %v156 = vmul.f32 %v155, 0.125
    %v157 = vmul.f32 %v148, %v148
    %v158 = vsub.f32 %v156, %v157
    %v159 = vmax.f32 %v158, 0.0
    %v160 = vsub.f32 %v141, %v148
    %v161 = vadd.f32 %v159, 1e-05
    %v162 = vrsqrt.pop %v161
    %v163 = vmul.f32 %v162, %v161
    %v164 = vmul.f32 %v163, %v162
    %v165 = vmul.f32 0.5, %v164
    %v166 = vsub.f32 1.5, %v165
    %v167 = vmul.f32 %v162, %v166
    %vm168 = vweird.f32 %v161
    %vm169 = vweird.f32 %v162
    %vm170 = vmor %vm168, %vm169
    %v171 = vsel %vm170, %v162, %v167
    %v172 = vmul.f32 %v160, %v171
    %s173 = scalar_lea.vmem [#allocation5], 32
    %v174 = vld [vmem:[%s173] sm:$0xf]
    %v175 = vld [vmem:[%s173 + $0x4] sm:$0xf]
    %v176 = vld [vmem:[%s173 + $0x8] sm:$0xf]
    %v177 = vld [vmem:[%s173 + $0xc] sm:$0xf]
    %v178 = vunpack.c.l.bf16 %v174
    %v179 = vunpack.c.l.bf16 %v175
    %v180 = vunpack.c.l.bf16 %v176
    %v181 = vunpack.c.l.bf16 %v177
    %v182 = vperm.slane %v181, 0
    %v184 = vsel %vm52, %v172, 0
    %186 = vmatpush.msra.mxu0 0.0
    %187 = vmatpush.msra.mxu0 0.0
    %188 = vmatpush.msra.mxu0 0.0
    %189 = vmatpush.msra.mxu0 0.0
    %190 = vmatpush.msra.mxu0 0.0
    %191 = vmatpush.msra.mxu0 0.0
    %192 = vmatpush.msra.mxu0 0.0
    %193 = vmatpush.msra.mxu0 0.0
    %194 = vmatpush.msra.mxu0 0.0
    %195 = vmatpush.msra.mxu0 0.0
    %196 = vmatpush.msra.mxu0 0.0
    %197 = vmatpush.msra.mxu0 0.0
    %198 = vmatpush.msra.mxu0 0.0
    %199 = vmatpush.msra.mxu0 %v180
    %200 = vmatpush.msra.mxu0 %v179
    %201 = vmatpush.msra.mxu0 %v178
    %202 = vmatmul.f32.gmra.mxu0 %v184
    %v203 = vpop.f32.mrf.mxu0
    %v204 = vadd.f32 %v182, %v203
    %205 = vdwg.mxu0
    %v206 = vtanh.pop %v204
    %s207 = scalar_lea.vmem [#allocation5], 48
    %v208 = vld [vmem:[%s207] sm:$0xf]
    %v209 = vld [vmem:[%s207 + $0x4] sm:$0xf]
    %v210 = vld [vmem:[%s207 + $0x8] sm:$0xf]
    %v211 = vld [vmem:[%s207 + $0xc] sm:$0xf]
    %v212 = vunpack.c.l.bf16 %v208
    %v213 = vunpack.c.l.bf16 %v209
    %v214 = vunpack.c.l.bf16 %v210
    %v215 = vunpack.c.l.bf16 %v211
    %v216 = vperm.slane %v215, 0
    %v218 = vsel %vm52, %v206, 0
    %220 = vmatpush.msra.mxu0 0.0
    %221 = vmatpush.msra.mxu0 0.0
    %222 = vmatpush.msra.mxu0 0.0
    %223 = vmatpush.msra.mxu0 0.0
    %224 = vmatpush.msra.mxu0 0.0
    %225 = vmatpush.msra.mxu0 0.0
    %226 = vmatpush.msra.mxu0 0.0
    %227 = vmatpush.msra.mxu0 0.0
    %228 = vmatpush.msra.mxu0 0.0
    %229 = vmatpush.msra.mxu0 0.0
    %230 = vmatpush.msra.mxu0 0.0
    %231 = vmatpush.msra.mxu0 0.0
    %232 = vmatpush.msra.mxu0 0.0
    %233 = vmatpush.msra.mxu0 %v214
    %234 = vmatpush.msra.mxu0 %v213
    %235 = vmatpush.msra.mxu0 %v212
    %236 = vmatmul.f32.gmra.mxu0 %v218
    %v237 = vpop.f32.mrf.mxu0
    %v238 = vadd.f32 %v216, %v237
    %239 = vdwg.mxu0
    %v240 = vtanh.pop %v238
    %v241 = vrot.slane %v240, 4
    %v242 = vadd.f32 %v240, %v241
    %v243 = vrot.slane %v242, 2
    %v244 = vadd.f32 %v242, %v243
    %v245 = vrot.slane %v244, 1
    %v246 = vadd.f32 %v244, %v245
    %v247 = vmul.f32 %v246, 0.125
    %v248 = vmul.f32 %v240, %v240
    %v249 = vrot.slane %v248, 4
    %v250 = vadd.f32 %v248, %v249
    %v251 = vrot.slane %v250, 2
    %v252 = vadd.f32 %v250, %v251
    %v253 = vrot.slane %v252, 1
    %v254 = vadd.f32 %v252, %v253
    %v255 = vmul.f32 %v254, 0.125
    %v256 = vmul.f32 %v247, %v247
    %v257 = vsub.f32 %v255, %v256
    %v258 = vmax.f32 %v257, 0.0
    %v259 = vsub.f32 %v240, %v247
    %v260 = vadd.f32 %v258, 1e-05
    %v261 = vrsqrt.pop %v260
    %v262 = vmul.f32 %v261, %v260
    %v263 = vmul.f32 %v262, %v261
    %v264 = vmul.f32 0.5, %v263
    %v265 = vsub.f32 1.5, %v264
    %v266 = vmul.f32 %v261, %v265
    %vm267 = vweird.f32 %v260
    %vm268 = vweird.f32 %v261
    %vm269 = vmor %vm267, %vm268
    %v270 = vsel %vm269, %v261, %v266
    %v271 = vmul.f32 %v259, %v270
    %s272 = scalar_lea.vmem [#allocation5], 64
    %v273 = vld [vmem:[%s272] sm:$0xf]
    %v274 = vld [vmem:[%s272 + $0x4] sm:$0xf]
    %v275 = vld [vmem:[%s272 + $0x8] sm:$0xf]
    %v276 = vld [vmem:[%s272 + $0xc] sm:$0xf]
    %v277 = vunpack.c.l.bf16 %v273
    %v278 = vunpack.c.l.bf16 %v274
    %v279 = vunpack.c.l.bf16 %v275
    %v280 = vunpack.c.l.bf16 %v276
    %v281 = vperm.slane %v280, 0
    %v283 = vsel %vm52, %v271, 0
    %285 = vmatpush.msra.mxu0 0.0
    %286 = vmatpush.msra.mxu0 0.0
    %287 = vmatpush.msra.mxu0 0.0
    %288 = vmatpush.msra.mxu0 0.0
    %289 = vmatpush.msra.mxu0 0.0
    %290 = vmatpush.msra.mxu0 0.0
    %291 = vmatpush.msra.mxu0 0.0
    %292 = vmatpush.msra.mxu0 0.0
    %293 = vmatpush.msra.mxu0 0.0
    %294 = vmatpush.msra.mxu0 0.0
    %295 = vmatpush.msra.mxu0 0.0
    %296 = vmatpush.msra.mxu0 0.0
    %297 = vmatpush.msra.mxu0 0.0
    %298 = vmatpush.msra.mxu0 %v279
    %299 = vmatpush.msra.mxu0 %v278
    %300 = vmatpush.msra.mxu0 %v277
    %301 = vmatmul.f32.gmra.mxu0 %v283
    %v302 = vpop.f32.mrf.mxu0
    %v303 = vadd.f32 %v281, %v302
    %304 = vdwg.mxu0
    %v305 = vtanh.pop %v303
    %v306 = vrot.slane %v305, 4
    %v307 = vadd.f32 %v305, %v306
    %v308 = vrot.slane %v307, 2
    %v309 = vadd.f32 %v307, %v308
    %v310 = vrot.slane %v309, 1
    %v311 = vadd.f32 %v309, %v310
    %v312 = vmul.f32 %v311, 0.125
    %v313 = vmul.f32 %v305, %v305
    %v314 = vrot.slane %v313, 4
    %v315 = vadd.f32 %v313, %v314
    %v316 = vrot.slane %v315, 2
    %v317 = vadd.f32 %v315, %v316
    %v318 = vrot.slane %v317, 1
    %v319 = vadd.f32 %v317, %v318
    %v320 = vmul.f32 %v319, 0.125
    %v321 = vmul.f32 %v312, %v312
    %v322 = vsub.f32 %v320, %v321
    %v323 = vmax.f32 %v322, 0.0
    %v324 = vsub.f32 %v305, %v312
    %v325 = vadd.f32 %v323, 1e-05
    %v326 = vrsqrt.pop %v325
    %v327 = vmul.f32 %v326, %v325
    %v328 = vmul.f32 %v327, %v326
    %v329 = vmul.f32 0.5, %v328
    %v330 = vsub.f32 1.5, %v329
    %v331 = vmul.f32 %v326, %v330
    %vm332 = vweird.f32 %v325
    %vm333 = vweird.f32 %v326
    %vm334 = vmor %vm332, %vm333
    %v335 = vsel %vm334, %v326, %v331
    %v336 = vmul.f32 %v324, %v335
    %s337 = scalar_lea.vmem [#allocation5], 80
    %v338 = vld [vmem:[%s337] sm:$0xf]
    %v339 = vld [vmem:[%s337 + $0x4] sm:$0xf]
    %v340 = vld [vmem:[%s337 + $0x8] sm:$0xf]
    %v341 = vld [vmem:[%s337 + $0xc] sm:$0xf]
    %v342 = vunpack.c.l.bf16 %v338
    %v343 = vunpack.c.l.bf16 %v339
    %v344 = vunpack.c.l.bf16 %v340
    %v345 = vunpack.c.l.bf16 %v341
    %v346 = vperm.slane %v345, 0
    %v348 = vsel %vm52, %v336, 0
    %350 = vmatpush.msra.mxu0 0.0
    %351 = vmatpush.msra.mxu0 0.0
    %352 = vmatpush.msra.mxu0 0.0
    %353 = vmatpush.msra.mxu0 0.0
    %354 = vmatpush.msra.mxu0 0.0
    %355 = vmatpush.msra.mxu0 0.0
    %356 = vmatpush.msra.mxu0 0.0
    %357 = vmatpush.msra.mxu0 0.0
    %358 = vmatpush.msra.mxu0 0.0
    %359 = vmatpush.msra.mxu0 0.0
    %360 = vmatpush.msra.mxu0 0.0
    %361 = vmatpush.msra.mxu0 0.0
    %362 = vmatpush.msra.mxu0 0.0
    %363 = vmatpush.msra.mxu0 %v344
    %364 = vmatpush.msra.mxu0 %v343
    %365 = vmatpush.msra.mxu0 %v342
    %366 = vmatmul.f32.gmra.mxu0 %v348
    %v367 = vpop.f32.mrf.mxu0
    %v368 = vadd.f32 %v346, %v367
    %369 = vdwg.mxu0
    %v370 = vtanh.pop %v368
    %371 = vst [vmem:[#allocation7] sm:$0xff] %v370
    // Predicated region
    $region18: #{tpu_custom_call.1} parent=1 // pred_check
      _
    $region19: #{tpu_custom_call.1} parent=1 // pred_check_branch
      %373 = sbr.rel (0) target = $region21
    $region20: #{tpu_custom_call.1} parent=1 // pred_region
      %375 = vsyncadd [#allocation4], 0
      %s377 = sshll.u32 [#allocation7], 4
      %s378 = int_to_ptr.vmem [resolvable:$true] %s377
      %s379 = sshll.u32 %s2, 4
      %s380 = int_to_ptr.hbm [resolvable:$true] %s379
      %382 = dma.vmem_to_hbm [thread:$0]  %s378, 128, %s380, [#allocation4]
    $region21: #{tpu_custom_call.1} parent=1 // pred_fallthru
      _
    // Predicated region
    $region22: #{tpu_custom_call.1} parent=1 // pred_check
      _
    $region23: #{tpu_custom_call.1} parent=1 // pred_check_branch
      %384 = sbr.rel (0) target = $region25
    $region24: #{tpu_custom_call.1} parent=1 // pred_region
      %386 = dma.done [#allocation4], 128
    $region25: #{tpu_custom_call.1} parent=1 // pred_fallthru
      _
    %387 = vsyncpa [#allocation3], 1
    %388 = vsyncpa [#allocation6], 1
    %389 = vsyncpa [#allocation4], 1

</llo_original>
